<compile_context>
chip_gen: v6e
topology: v6e:2x2x1
jax: 0.10.0
libtpu: 0.0.40
codegen_flags: <defaults>
</compile_context>

<pallas_src>
import functools

import jax
import jax.numpy as jnp
from jax.experimental import pallas as pl
from jax.experimental.pallas import tpu as pltpu

_COLS = 512            # lane-dense last dim (multiple of 128 -> unmasked vst)
_MAX_BLOCK_ROWS = 1024  # 1024 x 512 x 4B = 2 MiB per block
_TWO_PI = 6.283185307179586
_INV_2_24 = float(2.0 ** -24)


def _round_up(x, m):
    return ((x + m - 1) // m) * m


def _fmix32(x):
    """murmur3 finalizer: uint32 -> uint32, good avalanche, pure VALU ops."""
    x = x ^ (x >> jnp.uint32(16))
    x = x * jnp.uint32(0x85EBCA6B)
    x = x ^ (x >> jnp.uint32(13))
    x = x * jnp.uint32(0xC2B2AE35)
    x = x ^ (x >> jnp.uint32(16))
    return x


def _uniform(bits):
    """Top 24 bits of uint32 -> float32 uniform in [0, 1)."""
    hi = (bits >> jnp.uint32(8)).astype(jnp.int32).astype(jnp.float32)
    return hi * jnp.float32(_INV_2_24)


def _relu_pcff_train_kernel(seed_ref, t_ref, o_ref, *, hardness, c):
    block_rows, cols = t_ref.shape
    t = t_ref[...].astype(jnp.float32)
    ff = jnp.maximum(t, 0.0)                           # feedforward = relu(t)

    # --- counter-based PRNG: hash(global element index, seed) ------------
    row = jax.lax.broadcasted_iota(jnp.int32, (block_rows, cols), 0)
    col = jax.lax.broadcasted_iota(jnp.int32, (block_rows, cols), 1)
    lin = (pl.program_id(0) * block_rows + row) * cols + col
    base = (lin.astype(jnp.uint32)
            + seed_ref[0].astype(jnp.uint32) * jnp.uint32(0x9E3779B9))

    # Two uniforms -> Box-Muller standard normal (randn_like(t)).
    b1 = _fmix32(base)
    b2 = _fmix32(base ^ jnp.uint32(0xA511E9B3))
    u1 = ((b1 >> jnp.uint32(8)).astype(jnp.int32).astype(jnp.float32)
          + 1.0) * jnp.float32(_INV_2_24)              # (0, 1] -> log is safe
    u2 = _uniform(b2)                                   # [0, 1)
    z = jnp.sqrt(-2.0 * jnp.log(u1)) * jnp.cos(jnp.float32(_TWO_PI) * u2)

    # samplforward = relu(randn * tanh(t) * c + t)
    samp = jnp.maximum(z * jnp.tanh(t) * jnp.float32(c) + t, 0.0)

    if hardness >= 1.0:
        out = samp
    else:
        # bernoulli(hardness) mask from a third hash draw (single VALU compare).
        b3 = _fmix32(base ^ jnp.uint32(0x6A09E667))
        keep = _uniform(b3) < jnp.float32(hardness)
        out = jnp.where(keep, samp, ff)

    o_ref[...] = out.astype(o_ref.dtype)


def relu_pcff(t, *, hardness, c=1.0, training=False, seed=0):
    """Apply ReluPCFF.forward to tensor `t` (any shape, float dtype)."""
    if (not training) or hardness <= 0:
        # Eval path is a bare relu: skip Pallas so XLA can fuse it.
        return jnp.maximum(t, 0.0).astype(t.dtype)

    orig_shape = t.shape
    total = t.size
    cols = _COLS
    rows = pl.cdiv(total, cols)
    block_rows = min(_MAX_BLOCK_ROWS, _round_up(rows, 8))
    padded_rows = pl.cdiv(rows, block_rows) * block_rows
    pad = padded_rows * cols - total

    flat = t.reshape(-1)
    if pad:
        flat = jnp.pad(flat, (0, pad))
    x = flat.reshape(padded_rows, cols)

    seed_arr = jnp.asarray([seed], dtype=jnp.int32)
    kernel = functools.partial(_relu_pcff_train_kernel,
                               hardness=float(hardness), c=float(c))

    out = pl.pallas_call(
        kernel,
        out_shape=jax.ShapeDtypeStruct((padded_rows, cols), x.dtype),
        grid_spec=pltpu.PrefetchScalarGridSpec(
            num_scalar_prefetch=1,
            grid=(padded_rows // block_rows,),
            in_specs=[pl.BlockSpec((block_rows, cols), lambda i, seed: (i, 0))],
            out_specs=pl.BlockSpec((block_rows, cols), lambda i, seed: (i, 0)),
        ),
        compiler_params=pltpu.CompilerParams(
            # Counter-based PRNG -> no carried state -> grid steps independent,
            # so the axis can be sharded across v7x's two TensorCores.
            dimension_semantics=("parallel",)),
        cost_estimate=pl.CostEstimate(
            flops=50 * total,
            transcendentals=4 * total,
            bytes_accessed=2 * t.dtype.itemsize * total),
    )(seed_arr, x)

    return out.reshape(-1)[:total].reshape(orig_shape)


if __name__ == "__main__":
    key = jax.random.PRNGKey(0)
    # Small NCHW activation tensor consistent with an MNIST-style conv net.
    x = jax.random.normal(key, (2, 4, 16, 16), dtype=jnp.float32)

    # 1) eval path (deterministic relu) — exact match with jnp (no Pallas).
    y_eval = jax.block_until_ready(
        relu_pcff(x, hardness=0.5, c=1.0, training=False))
    assert y_eval.shape == x.shape and y_eval.dtype == x.dtype
    assert jnp.allclose(y_eval, jnp.maximum(x, 0.0))

    # 2) training path, hardness >= 1 (pure sampled forward) — Pallas kernel.
    y_hard = jax.block_until_ready(
        relu_pcff(x, hardness=1.0, c=1.0, training=True, seed=123))
    assert y_hard.shape == x.shape and y_hard.dtype == x.dtype
    assert bool(jnp.all(y_hard >= 0.0))                 # output of a relu
    assert bool(jnp.all(jnp.isfinite(y_hard)))

    # 3) training path, 0 < hardness < 1 (bernoulli mix) — Pallas kernel.
    y_mix = jax.block_until_ready(
        relu_pcff(x, hardness=0.3, c=1.0, training=True, seed=7))
    assert y_mix.shape == x.shape and y_mix.dtype == x.dtype
    assert bool(jnp.all(y_mix >= 0.0))
    assert bool(jnp.all(jnp.isfinite(y_mix)))

    print("KERNEL_OK")
</pallas_src>

<mosaic_0001>
module attributes {stable_mosaic.version = 11 : i64} {
  func.func @_relu_pcff_train_kernel(%arg0: i32, %arg1: memref<1xi32, #tpu.memory_space<smem>>, %arg2: memref<8x512xf32, #tpu.memory_space<vmem>>, %arg3: memref<8x512xf32, #tpu.memory_space<vmem>>) attributes {dimension_semantics = [#tpu.dimension_semantics<parallel>], iteration_bounds = array<i64: 1>, scalar_prefetch = 1 : i64, scratch_operands = 0 : i64, tpu.core_type = #tpu.core_type<tc>, window_params = [{transform_indices = @transform_0, window_bounds = array<i64: 8, 512>}, {transform_indices = @transform_1, window_bounds = array<i64: 8, 512>}]} {
    %c0 = arith.constant 0 : index
    %c0_0 = arith.constant 0 : index
    %0 = vector.load %arg2[%c0, %c0_0] : memref<8x512xf32, #tpu.memory_space<vmem>>, vector<8x512xf32>
    %1 = tpu.iota {dimensions = array<i32: 0>} : vector<8x512xi32>
    %2 = tpu.iota {dimensions = array<i32: 1>} : vector<8x512xi32>
    %c8_i32 = arith.constant 8 : i32
    %3 = arith.muli %arg0, %c8_i32 : i32
    %4 = vector.broadcast %3 : i32 to vector<8x512xi32>
    %5 = arith.addi %4, %1 : vector<8x512xi32>
    %c512_i32 = arith.constant 512 : i32
    %6 = vector.broadcast %c512_i32 : i32 to vector<8x512xi32>
    %7 = arith.muli %5, %6 : vector<8x512xi32>
    %8 = arith.addi %7, %2 : vector<8x512xi32>
    %c0_1 = arith.constant 0 : index
    %9 = memref.load %arg1[%c0_1] : memref<1xi32, #tpu.memory_space<smem>>
    %c-1640531527_i32 = arith.constant -1640531527 : i32
    %10 = arith.muli %9, %c-1640531527_i32 : i32
    %11 = vector.broadcast %10 : i32 to vector<8x512xi32>
    %12 = arith.addi %8, %11 : vector<8x512xi32>
    %c16_i32 = arith.constant 16 : i32
    %13 = vector.broadcast %c16_i32 : i32 to vector<8x512xi32>
    %14 = arith.shrui %12, %13 : vector<8x512xi32>
    %15 = arith.xori %12, %14 : vector<8x512xi32>
    %c-2048144789_i32 = arith.constant -2048144789 : i32
    %16 = vector.broadcast %c-2048144789_i32 : i32 to vector<8x512xi32>
    %17 = arith.muli %15, %16 : vector<8x512xi32>
    %c13_i32 = arith.constant 13 : i32
    %18 = vector.broadcast %c13_i32 : i32 to vector<8x512xi32>
    %19 = arith.shrui %17, %18 : vector<8x512xi32>
    %20 = arith.xori %17, %19 : vector<8x512xi32>
    %c-1028477387_i32 = arith.constant -1028477387 : i32
    %21 = vector.broadcast %c-1028477387_i32 : i32 to vector<8x512xi32>
    %22 = arith.muli %20, %21 : vector<8x512xi32>
    %c16_i32_2 = arith.constant 16 : i32
    %23 = vector.broadcast %c16_i32_2 : i32 to vector<8x512xi32>
    %24 = arith.shrui %22, %23 : vector<8x512xi32>
    %25 = arith.xori %22, %24 : vector<8x512xi32>
    %c-1525552717_i32 = arith.constant -1525552717 : i32
    %26 = vector.broadcast %c-1525552717_i32 : i32 to vector<8x512xi32>
    %27 = arith.xori %12, %26 : vector<8x512xi32>
    %c16_i32_3 = arith.constant 16 : i32
    %28 = vector.broadcast %c16_i32_3 : i32 to vector<8x512xi32>
    %29 = arith.shrui %27, %28 : vector<8x512xi32>
    %30 = arith.xori %27, %29 : vector<8x512xi32>
    %c-2048144789_i32_4 = arith.constant -2048144789 : i32
    %31 = vector.broadcast %c-2048144789_i32_4 : i32 to vector<8x512xi32>
    %32 = arith.muli %30, %31 : vector<8x512xi32>
    %c13_i32_5 = arith.constant 13 : i32
    %33 = vector.broadcast %c13_i32_5 : i32 to vector<8x512xi32>
    %34 = arith.shrui %32, %33 : vector<8x512xi32>
    %35 = arith.xori %32, %34 : vector<8x512xi32>
    %c-1028477387_i32_6 = arith.constant -1028477387 : i32
    %36 = vector.broadcast %c-1028477387_i32_6 : i32 to vector<8x512xi32>
    %37 = arith.muli %35, %36 : vector<8x512xi32>
    %c16_i32_7 = arith.constant 16 : i32
    %38 = vector.broadcast %c16_i32_7 : i32 to vector<8x512xi32>
    %39 = arith.shrui %37, %38 : vector<8x512xi32>
    %40 = arith.xori %37, %39 : vector<8x512xi32>
    %c8_i32_8 = arith.constant 8 : i32
    %41 = vector.broadcast %c8_i32_8 : i32 to vector<8x512xi32>
    %42 = arith.shrui %25, %41 : vector<8x512xi32>
    %43 = arith.sitofp %42 : vector<8x512xi32> to vector<8x512xf32>
    %cst = arith.constant 1.000000e+00 : f32
    %44 = vector.broadcast %cst : f32 to vector<8x512xf32>
    %45 = arith.addf %43, %44 : vector<8x512xf32>
    %cst_9 = arith.constant 5.96046448E-8 : f32
    %46 = vector.broadcast %cst_9 : f32 to vector<8x512xf32>
    %47 = arith.mulf %45, %46 : vector<8x512xf32>
    %c8_i32_10 = arith.constant 8 : i32
    %48 = vector.broadcast %c8_i32_10 : i32 to vector<8x512xi32>
    %49 = arith.shrui %40, %48 : vector<8x512xi32>
    %50 = arith.sitofp %49 : vector<8x512xi32> to vector<8x512xf32>
    %cst_11 = arith.constant 5.96046448E-8 : f32
    %51 = vector.broadcast %cst_11 : f32 to vector<8x512xf32>
    %52 = arith.mulf %50, %51 : vector<8x512xf32>
    %53 = math.log %47 : vector<8x512xf32>
    %cst_12 = arith.constant -2.000000e+00 : f32
    %54 = vector.broadcast %cst_12 : f32 to vector<8x512xf32>
    %55 = arith.mulf %54, %53 : vector<8x512xf32>
    %56 = math.sqrt %55 : vector<8x512xf32>
    %cst_13 = arith.constant 6.28318548 : f32
    %57 = vector.broadcast %cst_13 : f32 to vector<8x512xf32>
    %58 = arith.mulf %57, %52 : vector<8x512xf32>
    %59 = math.cos %58 : vector<8x512xf32>
    %60 = arith.mulf %56, %59 : vector<8x512xf32>
    %61 = math.tanh %0 : vector<8x512xf32>
    %62 = arith.mulf %60, %61 : vector<8x512xf32>
    %cst_14 = arith.constant 1.000000e+00 : f32
    %63 = vector.broadcast %cst_14 : f32 to vector<8x512xf32>
    %64 = arith.mulf %62, %63 : vector<8x512xf32>
    %65 = arith.addf %64, %0 : vector<8x512xf32>
    %cst_15 = arith.constant 0.000000e+00 : f32
    %66 = vector.broadcast %cst_15 : f32 to vector<8x512xf32>
    %67 = arith.maximumf %65, %66 : vector<8x512xf32>
    %c0_16 = arith.constant 0 : index
    %c0_17 = arith.constant 0 : index
    %68 = vector.load %arg3[%c0_16, %c0_17] : memref<8x512xf32, #tpu.memory_space<vmem>>, vector<8x512xf32>
    tpu.vector_store %arg3[%c0_16, %c0_17], %67 {strides = array<i32>} : memref<8x512xf32, #tpu.memory_space<vmem>>, vector<8x512xf32>,
    return
  }
  func.func @transform_0(%arg0: i32, %arg1: memref<1xi32, #tpu.memory_space<smem>>) -> (i32, i32) {
    %c0_i32 = arith.constant 0 : i32
    %c0_i32_0 = arith.constant 0 : i32
    return %arg0, %c0_i32 : i32, i32
  }
  func.func @transform_1(%arg0: i32, %arg1: memref<1xi32, #tpu.memory_space<smem>>) -> (i32, i32) {
    %c0_i32 = arith.constant 0 : i32
    %c0_i32_0 = arith.constant 0 : i32
    return %arg0, %c0_i32 : i32, i32
  }
}

</mosaic_0001>

<llo_original>
// kernel: tpu_custom_call.1
$region0: #{tpu_custom_call.1}
  #allocation0 [shape = 'u32[]', space=smem, size = 0x4, offset = 0x4, fixed_abs, tag = 'smem constant byte address 0x4 - core index']
  #allocation1 [shape = 'u32[144,128]{1,0:T(1,128)}', space=vmem, size = 0x12000, scoped, tag = 'internal scratch']
  #allocation2 [shape = 's32[1]{0}', space=sflag, size = 0x4, scoped, tag = 'scoped memory for tpu_custom_call.1']
  #allocation3 [shape = 's32[1]{0:T(128)S(6)}', space=smem, size = 0x200, scoped, tag = 'prefetched SMEM operand 0']
  %s0 = inlined_call_operand.<no memory space> [shape: s32[1], index: 0, kind: input, shape index: {}]
  %s1 = inlined_call_operand.hbm [shape: f32[8,512], index: 1, kind: input, shape index: {}]
  %s2 = inlined_call_operand.hbm [shape: f32[8,512], index: 2, kind: output, shape index: {}]
  %s3 = sld [smem:[#allocation0]]
  $region18: #{tpu_custom_call.1} parent=0
    _
  %s5 = ssub.s32 1, %s3
  %s6 = scalar_select 0, %s5, %s3
  %7 = sst [smem:[#allocation3]] %s0
  $region1: #{tpu_custom_call.1} parent=0
    #allocation4 [shape = 'u8[16384]{0}', space=vmem, size = 0x4000, scoped, tag = 'input window, operand 1, single buffered']
    #allocation5 [shape = 's32[1]{0}', space=sflag, size = 0x4, scoped, tag = 'scoped memory for tpu_custom_call.1']
    #allocation6 [shape = 's32[1]{0}', space=sflag, size = 0x4, scoped, tag = 'scoped memory for tpu_custom_call.1']
    #allocation7 [shape = 'u8[16384]{0}', space=vmem, size = 0x4000, scoped, tag = 'output window, operand 0, single buffered']
    %8 = vsyncpa [#allocation5], 0
    %9 = vsyncpa [#allocation6], 0
    // Predicated region
    $region2: #{tpu_custom_call.1} parent=1 // pred_check
      _
    $region3: #{tpu_custom_call.1} parent=1 // pred_check_branch
      %11 = sbr.rel (0) target = $region5
    $region4: #{tpu_custom_call.1} parent=1 // pred_region
      %s13 = ssub.s32 512, 512
      %14 = vsyncadd [#allocation5], %s13
      %s16 = sshll.u32 [#allocation4], 4
      %s17 = int_to_ptr.vmem [resolvable:$true] %s16
      %19 = dma.hbm_to_vmem [thread:$0]  %s1, 512, %s17, [#allocation5]
    $region5: #{tpu_custom_call.1} parent=1 // pred_fallthru
      _
    // Predicated region
    $region6: #{tpu_custom_call.1} parent=1 // pred_check
      _
    $region7: #{tpu_custom_call.1} parent=1 // pred_check_branch
      %21 = sbr.rel (0) target = $region9
    $region8: #{tpu_custom_call.1} parent=1 // pred_region
      %22 = dma.done [#allocation5], 512
    $region9: #{tpu_custom_call.1} parent=1 // pred_fallthru
      _
    %v23 = vld [vmem:[#allocation4] sm:$0xff]
    %v24 = vld [vmem:[#allocation4 + $0x8] sm:$0xff]
    %v25 = vld [vmem:[#allocation4 + $0x10] sm:$0xff]
    %v26 = vld [vmem:[#allocation4 + $0x18] sm:$0xff]
    %v27 = vlaneseq
    %v28 = vshrl.u32 %v27, 7
    %v29 = vlaneseq
    %v30 = vand.u32 %v29, 127
    %v31 = vadd.s32 %v30, 128
    %v32 = vadd.s32 %v30, 256
    %v33 = vadd.s32 %v30, 384
    %s34 = smul.u32 0, 8
    %v35 = vstv %s34
    %v36 = vadd.s32 %v35, %v28
    %v37 = vmul.u32 %v36, 512
    %v38 = vadd.s32 %v37, %v30
    %v39 = vadd.s32 %v37, %v31
    %v40 = vadd.s32 %v37, %v32
    %v41 = vadd.s32 %v37, %v33
    %s42 = sld [smem:[#allocation3]]
    %s43 = smul.u32 %s42, 2654435769
    %v44 = vstv %s43
    %v45 = vadd.s32 %v38, %v44
    %v46 = vadd.s32 %v39, %v44
    %v47 = vadd.s32 %v40, %v44
    %v48 = vadd.s32 %v41, %v44
    %v49 = vshrl.u32 %v45, 16
    %v50 = vshrl.u32 %v46, 16
    %v51 = vshrl.u32 %v47, 16
    %v52 = vshrl.u32 %v48, 16
    %v53 = vxor.u32 %v45, %v49
    %v54 = vxor.u32 %v46, %v50
    %v55 = vxor.u32 %v47, %v51
    %v56 = vxor.u32 %v48, %v52
    %v57 = vmul.u32 %v53, 2246822507
    %v58 = vmul.u32 %v54, 2246822507
    %v59 = vmul.u32 %v55, 2246822507
    %v60 = vmul.u32 %v56, 2246822507
    %v61 = vshrl.u32 %v57, 13
    %v62 = vshrl.u32 %v58, 13
    %v63 = vshrl.u32 %v59, 13
    %v64 = vshrl.u32 %v60, 13
    %v65 = vxor.u32 %v57, %v61
    %v66 = vxor.u32 %v58, %v62
    %v67 = vxor.u32 %v59, %v63
    %v68 = vxor.u32 %v60, %v64
    %v69 = vmul.u32 %v65, 3266489909
    %v70 = vmul.u32 %v66, 3266489909
    %v71 = vmul.u32 %v67, 3266489909
    %v72 = vmul.u32 %v68, 3266489909
    %v73 = vshrl.u32 %v69, 16
    %v74 = vshrl.u32 %v70, 16
    %v75 = vshrl.u32 %v71, 16
    %v76 = vshrl.u32 %v72, 16
    %v77 = vxor.u32 %v69, %v73
    %v78 = vxor.u32 %v70, %v74
    %v79 = vxor.u32 %v71, %v75
    %v80 = vxor.u32 %v72, %v76
    %v81 = vxor.u32 %v45, 2769414579
    %v82 = vxor.u32 %v46, 2769414579
    %v83 = vxor.u32 %v47, 2769414579
    %v84 = vxor.u32 %v48, 2769414579
    %v85 = vshrl.u32 %v81, 16
    %v86 = vshrl.u32 %v82, 16
    %v87 = vshrl.u32 %v83, 16
    %v88 = vshrl.u32 %v84, 16
    %v89 = vxor.u32 %v81, %v85
    %v90 = vxor.u32 %v82, %v86
    %v91 = vxor.u32 %v83, %v87
    %v92 = vxor.u32 %v84, %v88
    %v93 = vmul.u32 %v89, 2246822507
    %v94 = vmul.u32 %v90, 2246822507
    %v95 = vmul.u32 %v91, 2246822507
    %v96 = vmul.u32 %v92, 2246822507
    %v97 = vshrl.u32 %v93, 13
    %v98 = vshrl.u32 %v94, 13
    %v99 = vshrl.u32 %v95, 13
    %v100 = vshrl.u32 %v96, 13
    %v101 = vxor.u32 %v93, %v97
    %v102 = vxor.u32 %v94, %v98
    %v103 = vxor.u32 %v95, %v99
    %v104 = vxor.u32 %v96, %v100
    %v105 = vmul.u32 %v101, 3266489909
    %v106 = vmul.u32 %v102, 3266489909
    %v107 = vmul.u32 %v103, 3266489909
    %v108 = vmul.u32 %v104, 3266489909
    %v109 = vshrl.u32 %v105, 16
    %v110 = vshrl.u32 %v106, 16
    %v111 = vshrl.u32 %v107, 16
    %v112 = vshrl.u32 %v108, 16
    %v113 = vxor.u32 %v105, %v109
    %v114 = vxor.u32 %v106, %v110
    %v115 = vxor.u32 %v107, %v111
    %v116 = vxor.u32 %v108, %v112
    %v117 = vshrl.u32 %v77, 8
    %v118 = vshrl.u32 %v78, 8
    %v119 = vshrl.u32 %v79, 8
    %v120 = vshrl.u32 %v80, 8
    %v121 = vcvt.s32.f32 %v117
    %v122 = vcvt.s32.f32 %v118
    %v123 = vcvt.s32.f32 %v119
    %v124 = vcvt.s32.f32 %v120
    %v125 = vadd.f32 %v121, 1.0
    %v126 = vadd.f32 %v122, 1.0
    %v127 = vadd.f32 %v123, 1.0
    %v128 = vadd.f32 %v124, 1.0
    %v129 = vmul.f32 %v125, 5.9604645e-08
    %v130 = vmul.f32 %v126, 5.9604645e-08
    %v131 = vmul.f32 %v127, 5.9604645e-08
    %v132 = vmul.f32 %v128, 5.9604645e-08
    %v133 = vshrl.u32 %v113, 8
    %v134 = vshrl.u32 %v114, 8
    %v135 = vshrl.u32 %v115, 8
    %v136 = vshrl.u32 %v116, 8
    %v137 = vcvt.s32.f32 %v133
    %v138 = vcvt.s32.f32 %v134
    %v139 = vcvt.s32.f32 %v135
    %v140 = vcvt.s32.f32 %v136
    %v141 = vmul.f32 %v137, 5.9604645e-08
    %v142 = vmul.f32 %v138, 5.9604645e-08
    %v143 = vmul.f32 %v139, 5.9604645e-08
    %v144 = vmul.f32 %v140, 5.9604645e-08
    %v145 = vlog2.pop %v129
    %v146 = vmul.f32 %v145, 0.6931472
    %v147 = vlog2.pop %v130
    %v148 = vmul.f32 %v147, 0.6931472
    %v149 = vlog2.pop %v131
    %v150 = vmul.f32 %v149, 0.6931472
    %v151 = vlog2.pop %v132
    %v152 = vmul.f32 %v151, 0.6931472
    %v153 = vmul.f32 %v146, -2.0
    %v154 = vmul.f32 %v148, -2.0
    %v155 = vmul.f32 %v150, -2.0
    %v156 = vmul.f32 %v152, -2.0
    %v157 = vrsqrt.pop %v153
    %v158 = vmul.f32 %v153, %v157
    %vm159 = vcmp.eq.f32.partialorder %v153, inf
    %v160 = vsel %vm159, %v153, %v158
    %vm161 = vcmp.eq.f32.partialorder %v153, 0.0
    %v162 = vand.u32 %v153, 2147483648
    %v163 = vsel %vm161, %v162, %v160
    %v164 = vrsqrt.pop %v154
    %v165 = vmul.f32 %v154, %v164
    %vm166 = vcmp.eq.f32.partialorder %v154, inf
    %v167 = vsel %vm166, %v154, %v165
    %vm168 = vcmp.eq.f32.partialorder %v154, 0.0
    %v169 = vand.u32 %v154, 2147483648
    %v170 = vsel %vm168, %v169, %v167
    %v171 = vrsqrt.pop %v155
    %v172 = vmul.f32 %v155, %v171
    %vm173 = vcmp.eq.f32.partialorder %v155, inf
    %v174 = vsel %vm173, %v155, %v172
    %vm175 = vcmp.eq.f32.partialorder %v155, 0.0
    %v176 = vand.u32 %v155, 2147483648
    %v177 = vsel %vm175, %v176, %v174
    %v178 = vrsqrt.pop %v156
    %v179 = vmul.f32 %v156, %v178
    %vm180 = vcmp.eq.f32.partialorder %v156, inf
    %v181 = vsel %vm180, %v156, %v179
    %vm182 = vcmp.eq.f32.partialorder %v156, 0.0
    %v183 = vand.u32 %v156, 2147483648
    %v184 = vsel %vm182, %v183, %v181
    %v185 = vmul.f32 %v141, 6.2831855
    %v186 = vmul.f32 %v142, 6.2831855
    %v187 = vmul.f32 %v143, 6.2831855
    %v188 = vmul.f32 %v144, 6.2831855
    %v189 = vand.u32 2147483647, %v185
    %vm190 = vcmp.le.f32.partialorder %v189, 0.7853982
    %vm191 = vcmp.lt.s32.totalorder %v185, 0
    %v192 = vand.u32 %v185, 2139095040
    %v193 = vshrl.u32 %v192, 23
    %v194 = vsub.s32 %v193, 127
    %v195 = vand.u32 2147483647, %v185
    %v196 = vand.u32 %v195, 8388607
    %v197 = vor.u32 %v196, 8388608
    %v198 = vsub.s32 0, %v197
    %v199 = vadd.s32 %v194, 1
    %vm200 = vcmp.gt.s32.totalorder %v199, 0
    %v201 = vsel %vm200, %v199, 0
    %v202 = vshrl.u32 %v201, 5
    %v203 = vand.u32 %v201, 31
    %v204 = vsub.s32 32, %v203
    %v205 = vshrl.u32 683565275, %v204
    %v206 = vshll.u32 683565275, %v203
    %v207 = vshrl.u32 2475754826, %v204
    %v208 = vor.u32 %v206, %v207
    %v209 = vshll.u32 2475754826, %v203
    %v210 = vshrl.u32 2131351028, %v204
    %v211 = vor.u32 %v209, %v210
    %v212 = vshll.u32 2131351028, %v203
    %v213 = vshrl.u32 2102212464, %v204
    %v214 = vor.u32 %v212, %v213
    %v215 = vshll.u32 2102212464, %v203
    %v216 = vshrl.u32 920167782, %v204
    %v217 = vor.u32 %v215, %v216
    %v218 = vshll.u32 920167782, %v203
    %v219 = vshrl.u32 1326507024, %v204
    %v220 = vor.u32 %v218, %v219
    %vm221 = vcmp.lt.s32.totalorder %v202, 1
    %vm222 = vcmp.lt.s32.totalorder %v202, 2
    %vm223 = vcmp.lt.s32.totalorder %v202, 3
    %vm224 = vcmp.lt.s32.totalorder %v202, 4
    %v225 = vsel %vm221, %v205, %v208
    %v226 = vsel %vm224, %v214, 2102212464
    %v227 = vsel %vm223, %v211, %v226
    %v228 = vsel %vm222, %v225, %v227
    %v229 = vsel %vm221, %v208, %v211
    %v230 = vsel %vm224, %v217, 920167782
    %v231 = vsel %vm223, %v214, %v230
    %v232 = vsel %vm222, %v229, %v231
    %v233 = vsel %vm221, %v211, %v214
    %v234 = vsel %vm224, %v220, 1326507024
    %v235 = vsel %vm223, %v217, %v234
    %v236 = vsel %vm222, %v233, %v235
    %v237 = vshll.u32 %v197, 8
    %v238 = vmul.u32.u64.compose %v237, %v236
    %v239 = vextract.low.u32 %v238
    %v240 = vextract.high.u32 %v238
    %v241 = vmul.u32.u64.compose %v237, %v232
    %v242 = vextract.low.u32 %v241
    %v243 = vextract.high.u32 %v241
    %v244 = vmul.u32 %v237, %v228
    %v245 = vadd.s32 %v240, %v242
    %vm246 = vc.u32 %v240, %v242
    %v247 = vadd.s32 %v243, 1
    %v248 = vsel %vm246, %v247, %v243
    %v249 = vadd.s32 %v244, %v248
    %v250 = vadd.s32 %v249, 536870912
    %v251 = vshrl.u32 %v250, 30
    %v252 = vshll.u32 %v251, 30
    %v253 = vsub.s32 %v249, %v252
    %vm254 = vcmp.lt.s32.totalorder %v253, 0
    %v255 = vsub.s32 0, %v253
    %v256 = vsel %vm254, %v255, %v253
    %v257 = vclz %v256
    %v258 = vsub.s32 %v257, 2
    %vm259 = vcmp.gt.s32.totalorder 0, %v258
    %v260 = vsel %vm259, 0, %v258
    %v261 = vsub.s32 32, %v260
    %v262 = vshll.u32 %v253, %v260
    %v263 = vshrl.u32 %v245, %v261
    %v264 = vor.u32 %v262, %v263
    %v265 = vsub.s32 4294967266, %v260
    %v266 = vadd.s32 %v265, 127
    %v267 = vshll.u32 %v266, 23
    %v268 = vor.u32 4788187, %v267
    %v269 = vand.u32 2147483647, %v268
    %v271 = vcvt.s32.f32 %v264
    %v272 = vmul.f32 %v271, %v269
    %v273 = vxor.u32 %v272, 2147483648
    %v274 = vsel %vm191, %v273, %v272
    %v275 = vsub.s32 4, %v251
    %v276 = vsel %vm191, %v275, %v251
    %v277 = vsel %vm190, %v185, %v274
    %v278 = vsel %vm190, 0, %v276
    %v279 = vcosq.f32.pop %v277
    %v280 = vsinq.f32.pop %v277
    %vm281 = vweird.f32 %v185
    %v282 = vand.u32 %v278, 3
    %vm283 = vcmp.lt.s32.totalorder %v282, 2
    %vm284 = vcmp.eq.s32.totalorder %v282, 0
    %v285 = vxor.u32 %v280, 2147483648
    %v286 = vsel %vm284, %v279, %v285
    %vm287 = vcmp.eq.s32.totalorder %v282, 2
    %v288 = vxor.u32 %v279, 2147483648
    %v289 = vsel %vm287, %v288, %v280
    %v290 = vsel %vm283, %v286, %v289
    %v291 = vsel %vm281, nan, %v290
    %v292 = vand.u32 2147483647, %v186
    %vm293 = vcmp.le.f32.partialorder %v292, 0.7853982
    %vm294 = vcmp.lt.s32.totalorder %v186, 0
    %v295 = vand.u32 %v186, 2139095040
    %v296 = vshrl.u32 %v295, 23
    %v297 = vsub.s32 %v296, 127
    %v298 = vand.u32 2147483647, %v186
    %v299 = vand.u32 %v298, 8388607
    %v300 = vor.u32 %v299, 8388608
    %v301 = vsub.s32 0, %v300
    %v302 = vadd.s32 %v297, 1
    %vm303 = vcmp.gt.s32.totalorder %v302, 0
    %v304 = vsel %vm303, %v302, 0
    %v305 = vshrl.u32 %v304, 5
    %v306 = vand.u32 %v304, 31
    %v307 = vsub.s32 32, %v306
    %v308 = vshrl.u32 683565275, %v307
    %v309 = vshll.u32 683565275, %v306
    %v310 = vshrl.u32 2475754826, %v307
    %v311 = vor.u32 %v309, %v310
    %v312 = vshll.u32 2475754826, %v306
    %v313 = vshrl.u32 2131351028, %v307
    %v314 = vor.u32 %v312, %v313
    %v315 = vshll.u32 2131351028, %v306
    %v316 = vshrl.u32 2102212464, %v307
    %v317 = vor.u32 %v315, %v316
    %v318 = vshll.u32 2102212464, %v306
    %v319 = vshrl.u32 920167782, %v307
    %v320 = vor.u32 %v318, %v319
    %v321 = vshll.u32 920167782, %v306
    %v322 = vshrl.u32 1326507024, %v307
    %v323 = vor.u32 %v321, %v322
    %vm324 = vcmp.lt.s32.totalorder %v305, 1
    %vm325 = vcmp.lt.s32.totalorder %v305, 2
    %vm326 = vcmp.lt.s32.totalorder %v305, 3
    %vm327 = vcmp.lt.s32.totalorder %v305, 4
    %v328 = vsel %vm324, %v308, %v311
    %v329 = vsel %vm327, %v317, 2102212464
    %v330 = vsel %vm326, %v314, %v329
    %v331 = vsel %vm325, %v328, %v330
    %v332 = vsel %vm324, %v311, %v314
    %v333 = vsel %vm327, %v320, 920167782
    %v334 = vsel %vm326, %v317, %v333
    %v335 = vsel %vm325, %v332, %v334
    %v336 = vsel %vm324, %v314, %v317
    %v337 = vsel %vm327, %v323, 1326507024
    %v338 = vsel %vm326, %v320, %v337
    %v339 = vsel %vm325, %v336, %v338
    %v340 = vshll.u32 %v300, 8
    %v341 = vmul.u32.u64.compose %v340, %v339
    %v342 = vextract.low.u32 %v341
    %v343 = vextract.high.u32 %v341
    %v344 = vmul.u32.u64.compose %v340, %v335
    %v345 = vextract.low.u32 %v344
    %v346 = vextract.high.u32 %v344
    %v347 = vmul.u32 %v340, %v331
    %v348 = vadd.s32 %v343, %v345
    %vm349 = vc.u32 %v343, %v345
    %v350 = vadd.s32 %v346, 1
    %v351 = vsel %vm349, %v350, %v346
    %v352 = vadd.s32 %v347, %v351
    %v353 = vadd.s32 %v352, 536870912
    %v354 = vshrl.u32 %v353, 30
    %v355 = vshll.u32 %v354, 30
    %v356 = vsub.s32 %v352, %v355
    %vm357 = vcmp.lt.s32.totalorder %v356, 0
    %v358 = vsub.s32 0, %v356
    %v359 = vsel %vm357, %v358, %v356
    %v360 = vclz %v359
    %v361 = vsub.s32 %v360, 2
    %vm362 = vcmp.gt.s32.totalorder 0, %v361
    %v363 = vsel %vm362, 0, %v361
    %v364 = vsub.s32 32, %v363
    %v365 = vshll.u32 %v356, %v363
    %v366 = vshrl.u32 %v348, %v364
    %v367 = vor.u32 %v365, %v366
    %v368 = vsub.s32 4294967266, %v363
    %v369 = vadd.s32 %v368, 127
    %v370 = vshll.u32 %v369, 23
    %v371 = vor.u32 4788187, %v370
    %v372 = vand.u32 2147483647, %v371
    %v374 = vcvt.s32.f32 %v367
    %v375 = vmul.f32 %v374, %v372
    %v376 = vxor.u32 %v375, 2147483648
    %v377 = vsel %vm294, %v376, %v375
    %v378 = vsub.s32 4, %v354
    %v379 = vsel %vm294, %v378, %v354
    %v380 = vsel %vm293, %v186, %v377
    %v381 = vsel %vm293, 0, %v379
    %v382 = vcosq.f32.pop %v380
    %v383 = vsinq.f32.pop %v380
    %vm384 = vweird.f32 %v186
    %v385 = vand.u32 %v381, 3
    %vm386 = vcmp.lt.s32.totalorder %v385, 2
    %vm387 = vcmp.eq.s32.totalorder %v385, 0
    %v388 = vxor.u32 %v383, 2147483648
    %v389 = vsel %vm387, %v382, %v388
    %vm390 = vcmp.eq.s32.totalorder %v385, 2
    %v391 = vxor.u32 %v382, 2147483648
    %v392 = vsel %vm390, %v391, %v383
    %v393 = vsel %vm386, %v389, %v392
    %v394 = vsel %vm384, nan, %v393
    %v395 = vand.u32 2147483647, %v187
    %vm396 = vcmp.le.f32.partialorder %v395, 0.7853982
    %vm397 = vcmp.lt.s32.totalorder %v187, 0
    %v398 = vand.u32 %v187, 2139095040
    %v399 = vshrl.u32 %v398, 23
    %v400 = vsub.s32 %v399, 127
    %v401 = vand.u32 2147483647, %v187
    %v402 = vand.u32 %v401, 8388607
    %v403 = vor.u32 %v402, 8388608
    %v404 = vsub.s32 0, %v403
    %v405 = vadd.s32 %v400, 1
    %vm406 = vcmp.gt.s32.totalorder %v405, 0
    %v407 = vsel %vm406, %v405, 0
    %v408 = vshrl.u32 %v407, 5
    %v409 = vand.u32 %v407, 31
    %v410 = vsub.s32 32, %v409
    %v411 = vshrl.u32 683565275, %v410
    %v412 = vshll.u32 683565275, %v409
    %v413 = vshrl.u32 2475754826, %v410
    %v414 = vor.u32 %v412, %v413
    %v415 = vshll.u32 2475754826, %v409
    %v416 = vshrl.u32 2131351028, %v410
    %v417 = vor.u32 %v415, %v416
    %v418 = vshll.u32 2131351028, %v409
    %v419 = vshrl.u32 2102212464, %v410
    %v420 = vor.u32 %v418, %v419
    %v421 = vshll.u32 2102212464, %v409
    %v422 = vshrl.u32 920167782, %v410
    %v423 = vor.u32 %v421, %v422
    %v424 = vshll.u32 920167782, %v409
    %v425 = vshrl.u32 1326507024, %v410
    %v426 = vor.u32 %v424, %v425
    %vm427 = vcmp.lt.s32.totalorder %v408, 1
    %vm428 = vcmp.lt.s32.totalorder %v408, 2
    %vm429 = vcmp.lt.s32.totalorder %v408, 3
    %vm430 = vcmp.lt.s32.totalorder %v408, 4
    %v431 = vsel %vm427, %v411, %v414
    %v432 = vsel %vm430, %v420, 2102212464
    %v433 = vsel %vm429, %v417, %v432
    %v434 = vsel %vm428, %v431, %v433
    %v435 = vsel %vm427, %v414, %v417
    %v436 = vsel %vm430, %v423, 920167782
    %v437 = vsel %vm429, %v420, %v436
    %v438 = vsel %vm428, %v435, %v437
    %v439 = vsel %vm427, %v417, %v420
    %v440 = vsel %vm430, %v426, 1326507024
    %v441 = vsel %vm429, %v423, %v440
    %v442 = vsel %vm428, %v439, %v441
    %v443 = vshll.u32 %v403, 8
    %v444 = vmul.u32.u64.compose %v443, %v442
    %v445 = vextract.low.u32 %v444
    %v446 = vextract.high.u32 %v444
    %v447 = vmul.u32.u64.compose %v443, %v438
    %v448 = vextract.low.u32 %v447
    %v449 = vextract.high.u32 %v447
    %v450 = vmul.u32 %v443, %v434
    %v451 = vadd.s32 %v446, %v448
    %vm452 = vc.u32 %v446, %v448
    %v453 = vadd.s32 %v449, 1
    %v454 = vsel %vm452, %v453, %v449
    %v455 = vadd.s32 %v450, %v454
    %v456 = vadd.s32 %v455, 536870912
    %v457 = vshrl.u32 %v456, 30
    %v458 = vshll.u32 %v457, 30
    %v459 = vsub.s32 %v455, %v458
    %vm460 = vcmp.lt.s32.totalorder %v459, 0
    %v461 = vsub.s32 0, %v459
    %v462 = vsel %vm460, %v461, %v459
    %v463 = vclz %v462
    %v464 = vsub.s32 %v463, 2
    %vm465 = vcmp.gt.s32.totalorder 0, %v464
    %v466 = vsel %vm465, 0, %v464
    %v467 = vsub.s32 32, %v466
    %v468 = vshll.u32 %v459, %v466
    %v469 = vshrl.u32 %v451, %v467
    %v470 = vor.u32 %v468, %v469
    %v471 = vsub.s32 4294967266, %v466
    %v472 = vadd.s32 %v471, 127
    %v473 = vshll.u32 %v472, 23
    %v474 = vor.u32 4788187, %v473
    %v475 = vand.u32 2147483647, %v474
    %v477 = vcvt.s32.f32 %v470
    %v478 = vmul.f32 %v477, %v475
    %v479 = vxor.u32 %v478, 2147483648
    %v480 = vsel %vm397, %v479, %v478
    %v481 = vsub.s32 4, %v457
    %v482 = vsel %vm397, %v481, %v457
    %v483 = vsel %vm396, %v187, %v480
    %v484 = vsel %vm396, 0, %v482
    %v485 = vcosq.f32.pop %v483
    %v486 = vsinq.f32.pop %v483
    %vm487 = vweird.f32 %v187
    %v488 = vand.u32 %v484, 3
    %vm489 = vcmp.lt.s32.totalorder %v488, 2
    %vm490 = vcmp.eq.s32.totalorder %v488, 0
    %v491 = vxor.u32 %v486, 2147483648
    %v492 = vsel %vm490, %v485, %v491
    %vm493 = vcmp.eq.s32.totalorder %v488, 2
    %v494 = vxor.u32 %v485, 2147483648
    %v495 = vsel %vm493, %v494, %v486
    %v496 = vsel %vm489, %v492, %v495
    %v497 = vsel %vm487, nan, %v496
    %v498 = vand.u32 2147483647, %v188
    %vm499 = vcmp.le.f32.partialorder %v498, 0.7853982
    %vm500 = vcmp.lt.s32.totalorder %v188, 0
    %v501 = vand.u32 %v188, 2139095040
    %v502 = vshrl.u32 %v501, 23
    %v503 = vsub.s32 %v502, 127
    %v504 = vand.u32 2147483647, %v188
    %v505 = vand.u32 %v504, 8388607
    %v506 = vor.u32 %v505, 8388608
    %v507 = vsub.s32 0, %v506
    %v508 = vadd.s32 %v503, 1
    %vm509 = vcmp.gt.s32.totalorder %v508, 0
    %v510 = vsel %vm509, %v508, 0
    %v511 = vshrl.u32 %v510, 5
    %v512 = vand.u32 %v510, 31
    %v513 = vsub.s32 32, %v512
    %v514 = vshrl.u32 683565275, %v513
    %v515 = vshll.u32 683565275, %v512
    %v516 = vshrl.u32 2475754826, %v513
    %v517 = vor.u32 %v515, %v516
    %v518 = vshll.u32 2475754826, %v512
    %v519 = vshrl.u32 2131351028, %v513
    %v520 = vor.u32 %v518, %v519
    %v521 = vshll.u32 2131351028, %v512
    %v522 = vshrl.u32 2102212464, %v513
    %v523 = vor.u32 %v521, %v522
    %v524 = vshll.u32 2102212464, %v512
    %v525 = vshrl.u32 920167782, %v513
    %v526 = vor.u32 %v524, %v525
    %v527 = vshll.u32 920167782, %v512
    %v528 = vshrl.u32 1326507024, %v513
    %v529 = vor.u32 %v527, %v528
    %vm530 = vcmp.lt.s32.totalorder %v511, 1
    %vm531 = vcmp.lt.s32.totalorder %v511, 2
    %vm532 = vcmp.lt.s32.totalorder %v511, 3
    %vm533 = vcmp.lt.s32.totalorder %v511, 4
    %v534 = vsel %vm530, %v514, %v517
    %v535 = vsel %vm533, %v523, 2102212464
    %v536 = vsel %vm532, %v520, %v535
    %v537 = vsel %vm531, %v534, %v536
    %v538 = vsel %vm530, %v517, %v520
    %v539 = vsel %vm533, %v526, 920167782
    %v540 = vsel %vm532, %v523, %v539
    %v541 = vsel %vm531, %v538, %v540
    %v542 = vsel %vm530, %v520, %v523
    %v543 = vsel %vm533, %v529, 1326507024
    %v544 = vsel %vm532, %v526, %v543
    %v545 = vsel %vm531, %v542, %v544
    %v546 = vshll.u32 %v506, 8
    %v547 = vmul.u32.u64.compose %v546, %v545
    %v548 = vextract.low.u32 %v547
    %v549 = vextract.high.u32 %v547
    %v550 = vmul.u32.u64.compose %v546, %v541
    %v551 = vextract.low.u32 %v550
    %v552 = vextract.high.u32 %v550
    %v553 = vmul.u32 %v546, %v537
    %v554 = vadd.s32 %v549, %v551
    %vm555 = vc.u32 %v549, %v551
    %v556 = vadd.s32 %v552, 1
    %v557 = vsel %vm555, %v556, %v552
    %v558 = vadd.s32 %v553, %v557
    %v559 = vadd.s32 %v558, 536870912
    %v560 = vshrl.u32 %v559, 30
    %v561 = vshll.u32 %v560, 30
    %v562 = vsub.s32 %v558, %v561
    %vm563 = vcmp.lt.s32.totalorder %v562, 0
    %v564 = vsub.s32 0, %v562
    %v565 = vsel %vm563, %v564, %v562
    %v566 = vclz %v565
    %v567 = vsub.s32 %v566, 2
    %vm568 = vcmp.gt.s32.totalorder 0, %v567
    %v569 = vsel %vm568, 0, %v567
    %v570 = vsub.s32 32, %v569
    %v571 = vshll.u32 %v562, %v569
    %v572 = vshrl.u32 %v554, %v570
    %v573 = vor.u32 %v571, %v572
    %v574 = vsub.s32 4294967266, %v569
    %v575 = vadd.s32 %v574, 127
    %v576 = vshll.u32 %v575, 23
    %v577 = vor.u32 4788187, %v576
    %v578 = vand.u32 2147483647, %v577
    %v580 = vcvt.s32.f32 %v573
    %v581 = vmul.f32 %v580, %v578
    %v582 = vxor.u32 %v581, 2147483648
    %v583 = vsel %vm500, %v582, %v581
    %v584 = vsub.s32 4, %v560
    %v585 = vsel %vm500, %v584, %v560
    %v586 = vsel %vm499, %v188, %v583
    %v587 = vsel %vm499, 0, %v585
    %v588 = vcosq.f32.pop %v586
    %v589 = vsinq.f32.pop %v586
    %vm590 = vweird.f32 %v188
    %v591 = vand.u32 %v587, 3
    %vm592 = vcmp.lt.s32.totalorder %v591, 2
    %vm593 = vcmp.eq.s32.totalorder %v591, 0
    %v594 = vxor.u32 %v589, 2147483648
    %v595 = vsel %vm593, %v588, %v594
    %vm596 = vcmp.eq.s32.totalorder %v591, 2
    %v597 = vxor.u32 %v588, 2147483648
    %v598 = vsel %vm596, %v597, %v589
    %v599 = vsel %vm592, %v595, %v598
    %v600 = vsel %vm590, nan, %v599
    %v601 = vmul.f32 %v163, %v291
    %v602 = vmul.f32 %v170, %v394
    %v603 = vmul.f32 %v177, %v497
    %v604 = vmul.f32 %v184, %v600
    %v605 = vtanh.pop %v23
    %v606 = vtanh.pop %v24
    %v607 = vtanh.pop %v25
    %v608 = vtanh.pop %v26
    %v609 = vmul.f32 %v601, %v605
    %v610 = vmul.f32 %v602, %v606
    %v611 = vmul.f32 %v603, %v607
    %v612 = vmul.f32 %v604, %v608
    %v613 = vadd.f32 %v609, %v23
    %v614 = vadd.f32 %v610, %v24
    %v615 = vadd.f32 %v611, %v25
    %v616 = vadd.f32 %v612, %v26
    %v617 = vmax.f32 %v613, 0.0
    %v618 = vmax.f32 %v614, 0.0
    %v619 = vmax.f32 %v615, 0.0
    %v620 = vmax.f32 %v616, 0.0
    %621 = vst [vmem:[#allocation7] sm:$0xff] %v617
    %622 = vst [vmem:[#allocation7 + $0x8] sm:$0xff] %v618
    %623 = vst [vmem:[#allocation7 + $0x10] sm:$0xff] %v619
    %624 = vst [vmem:[#allocation7 + $0x18] sm:$0xff] %v620
    // Predicated region
    $region10: #{tpu_custom_call.1} parent=1 // pred_check
      _
    $region11: #{tpu_custom_call.1} parent=1 // pred_check_branch
      %626 = sbr.rel (0) target = $region13
    $region12: #{tpu_custom_call.1} parent=1 // pred_region
      %s628 = ssub.s32 512, 512
      %629 = vsyncadd [#allocation6], %s628
      %s631 = sshll.u32 [#allocation7], 4
      %s632 = int_to_ptr.vmem [resolvable:$true] %s631
      %634 = dma.vmem_to_hbm [thread:$0]  %s632, 512, %s2, [#allocation6]
    $region13: #{tpu_custom_call.1} parent=1 // pred_fallthru
      _
    // Predicated region
    $region14: #{tpu_custom_call.1} parent=1 // pred_check
      _
    $region15: #{tpu_custom_call.1} parent=1 // pred_check_branch
      %636 = sbr.rel (0) target = $region17
    $region16: #{tpu_custom_call.1} parent=1 // pred_region
      %637 = dma.done [#allocation6], 512
    $region17: #{tpu_custom_call.1} parent=1 // pred_fallthru
      _
    %638 = vsyncpa [#allocation5], 1
    %639 = vsyncpa [#allocation6], 1

</llo_original>
